<compile_context>
chip_gen: v5e
topology: v5e:2x2
jax: 0.10.0
libtpu: 0.0.40
codegen_flags: <defaults>
</compile_context>

<pallas_src>
import functools

import jax
import jax.numpy as jnp
import numpy as np
from jax.experimental import pallas as pl
from jax.experimental.pallas import tpu as pltpu


def _cdiv(a, b):
    return (a + b - 1) // b


def _vmem_capacity_bytes():
    try:
        return int(pltpu.get_tpu_info().vmem_capacity_bytes)
    except Exception:
        return 64 * 1024 * 1024  # conservative fallback (v7x-sized VMEM)


def _is_v7x():
    try:
        return "v7" in jax.devices()[0].device_kind.lower()
    except Exception:
        return False


def _step_vmem_bytes(tb, r, d, e, x_isize, out_isize):
    """Per-grid-step VMEM estimate, including the in-kernel f32 intermediates."""
    tm = tb * r
    x_blocks = 2 * tm * d * x_isize            # double-buffered activation blocks
    feat_blocks = 2 * tm * e * out_isize       # double-buffered feature output blocks
    mean_blocks = 2 * tb * e * out_isize       # double-buffered mean output blocks
    weight = e * d * 2                         # resident bf16 weight (single buffer)
    bias = 2 * e * 4
    # compiler-managed intermediates: bf16 x copy, f32 y and feat, pooling matrix
    interm = tm * d * 2 + 2 * tm * e * 4 + tb * tm * 4 + tm * 4
    return x_blocks + feat_blocks + mean_blocks + weight + bias + int(1.15 * interm) + (2 << 20)


def _choose_tb(batch, r, est_fn, budget, target_rows):
    """Batch elements per grid step.

    tb must equal `batch` (full-extent output blocks) or be a multiple of 8 so
    the (tb, E) mean block is sublane-aligned.
    """
    if batch <= 8:
        return batch
    if batch * r <= target_rows and est_fn(batch) <= budget:
        return batch                            # whole problem in one fat step
    tb = max(8, min((batch // 8) * 8, (max(target_rows // r, 8) // 8) * 8))
    while tb > 8 and est_fn(tb) > budget:
        tb -= 8
    return tb


def _encoder_kernel(x_ref, w_ref, b_ref, feat_ref, mean_ref, *,
                    r, inv_r, eps, total_rows, ragged, normalize):
    # x_ref:    (TM, D)  activations (original dtype) for TB = TM // R batch elems
    # w_ref:    (E, D)   bf16 fc weight, torch layout (contracted on its last dim)
    # b_ref:    (1, E)   f32 fc bias
    # feat_ref: (TM, E)  features out
    # mean_ref: (TB, E)  per-batch mean out
    tm = x_ref.shape[0]
    tb = tm // r

    # bf16 cast on the VPU (hidden under the MXU work); f32 accumulation.
    x = x_ref[...].astype(jnp.bfloat16)
    y = jax.lax.dot_general(
        x, w_ref[...],
        dimension_numbers=(((1,), (1,)), ((), ())),   # contract D with D
        preferred_element_type=jnp.float32)
    y = y + b_ref[...]                                # (TM, E) f32

    if ragged:
        # The final batch block extends past B*R rows: zero the garbage rows so
        # they cannot leak into the per-batch mean through the pooling matmul
        # (their feature / mean stores are dropped by the out-of-range write
        # masking anyway).
        row0 = pl.program_id(0) * tm
        rid = jax.lax.broadcasted_iota(jnp.int32, (tm, 1), 0) + row0
        y = jnp.where(rid < total_rows, y, 0.0)

    if normalize:
        ssq = jnp.sum(y * y, axis=-1, keepdims=True)
        # Single EUP rsqrt; eps folded as eps^2 (numerically equivalent to
        # torch's x / (sqrt(ssq) + eps) at eps = 1e-8).
        feat = y * jax.lax.rsqrt(ssq + eps * eps)
    else:
        feat = y

    feat_ref[...] = feat.astype(feat_ref.dtype)

    # Per-batch mean over the R region rows via a tiny pooling matmul; avoids a
    # sublane-misaligned (TM, E) -> (TB, R, E) reshape when R % 8 != 0.
    bidx = jax.lax.broadcasted_iota(jnp.int32, (tb, tm), 0)
    cidx = jax.lax.broadcasted_iota(jnp.int32, (tb, tm), 1)
    start = bidx * r
    pool = jnp.where((cidx >= start) & (cidx < start + r),
                     inv_r, 0.0).astype(jnp.float32)
    mean = jax.lax.dot_general(
        pool, feat,
        dimension_numbers=(((1,), (0,)), ((), ())),
        preferred_element_type=jnp.float32)
    mean_ref[...] = mean.astype(mean_ref.dtype)


def encoder_image_precomp(images, weight, bias, *, no_imgnorm=False, eps=1e-8,
                          block_batch=None):
    """images: (B, R, D); weight: (E, D) torch Linear layout; bias: (E,)."""
    B, R, D = images.shape
    E = weight.shape[0]
    out_dtype = images.dtype
    x_isize = jnp.dtype(images.dtype).itemsize
    out_isize = jnp.dtype(out_dtype).itemsize

    # Generation-aware VMEM budget (128 MiB on v5e/v6e, 64 MiB on v7x).
    vmem_cap = _vmem_capacity_bytes()
    budget = int(vmem_cap * 0.65)
    target_rows = 2048 if vmem_cap >= (96 << 20) else 1024
    est_fn = lambda t: _step_vmem_bytes(t, R, D, E, x_isize, out_isize)

    if block_batch is not None:
        tb = int(block_batch)
        assert tb == B or (tb % 8 == 0 and 0 < tb <= B), \
            "block_batch must equal B or be a positive multiple of 8"
    else:
        tb = _choose_tb(B, R, est_fn, budget, target_rows)

    num_steps = _cdiv(B, tb)
    # Only v7x (2 TensorCores) benefits from forcing >= 2 grid steps.
    if block_batch is None and num_steps == 1 and B > 8 and _is_v7x():
        tb_half = ((_cdiv(B, 2) + 7) // 8) * 8
        if tb_half < B and tb_half * R >= 256:
            tb = tb_half
            num_steps = _cdiv(B, tb)

    tm = tb * R
    total_rows = B * R
    ragged = (B % tb) != 0
    vmem_limit = int(min(max(vmem_cap - (8 << 20), 16 << 20),
                         max(est_fn(tb) + (16 << 20), 64 << 20)))

    x2 = images.reshape(total_rows, D)          # free reshape, no HBM pass
    w = weight.astype(jnp.bfloat16)             # small; stays in (E, D) layout
    b2 = bias.astype(jnp.float32).reshape(1, E)

    kernel = functools.partial(
        _encoder_kernel, r=R, inv_r=1.0 / R, eps=float(eps),
        total_rows=total_rows, ragged=ragged, normalize=not no_imgnorm)

    def call(single_buffer_weights):
        def const_spec(shape):
            idx = lambda i: (0,) * len(shape)
            if single_buffer_weights and hasattr(pl, "Buffered"):
                try:
                    # Constant index_map => the second buffer is dead; drop it.
                    return pl.BlockSpec(shape, idx, pipeline_mode=pl.Buffered(1))
                except (TypeError, ValueError):
                    pass
            return pl.BlockSpec(shape, idx)

        return pl.pallas_call(
            kernel,
            out_shape=(
                jax.ShapeDtypeStruct((total_rows, E), out_dtype),
                jax.ShapeDtypeStruct((B, E), out_dtype),
            ),
            grid_spec=pltpu.PrefetchScalarGridSpec(
                num_scalar_prefetch=0,
                grid=(num_steps,),
                in_specs=[
                    pl.BlockSpec((tm, D), lambda i: (i, 0)),   # activations
                    const_spec((E, D)),                        # resident fc weight
                    const_spec((1, E)),                        # resident fc bias
                ],
                out_specs=[
                    pl.BlockSpec((tm, E), lambda i: (i, 0)),   # features
                    pl.BlockSpec((tb, E), lambda i: (i, 0)),   # per-batch mean
                ],
            ),
            compiler_params=pltpu.CompilerParams(
                dimension_semantics=("parallel",),
                vmem_limit_bytes=vmem_limit,
            ),
        )(x2, w, b2)

    try:
        feat2, mean = call(single_buffer_weights=True)
    except Exception:
        # pl.Buffered(1) unsupported on this jax version: retry with default
        # (still constant-index) weight/bias specs.
        feat2, mean = call(single_buffer_weights=False)

    return feat2.reshape(B, R, E), mean   # free reshape, no HBM pass


def _reference(images, weight, bias, *, no_imgnorm=False, eps=1e-8):
    # Mirrors the kernel's bf16 MXU inputs with f32 accumulation / f32 epilogue.
    x = images.astype(jnp.bfloat16)
    w = weight.astype(jnp.bfloat16)
    y = jnp.einsum("brd,ed->bre", x, w, preferred_element_type=jnp.float32)
    y = y + bias.astype(jnp.float32)
    if not no_imgnorm:
        y = y * jax.lax.rsqrt(jnp.sum(y * y, axis=-1, keepdims=True) + eps * eps)
    return y.astype(images.dtype), jnp.mean(y, axis=1).astype(images.dtype)


if __name__ == "__main__":
    def run_case(case_key, B, R, D, E, block_batch=None, random_bias=False):
        k_img, k_w, k_b = jax.random.split(case_key, 3)
        images = jax.random.normal(k_img, (B, R, D), dtype=jnp.float32)
        # Xavier init for fc, matching the module's init_weights():
        #   r = sqrt(6)/sqrt(in+out); weight ~ U(-r, r); bias = 0.
        r = np.sqrt(6.0) / np.sqrt(D + E)
        weight = jax.random.uniform(k_w, (E, D), minval=-r, maxval=r,
                                    dtype=jnp.float32)   # torch layout (out, in)
        bias = (0.1 * jax.random.normal(k_b, (E,), dtype=jnp.float32)
                if random_bias else jnp.zeros((E,), dtype=jnp.float32))

        feat, feat_mean = encoder_image_precomp(images, weight, bias,
                                                block_batch=block_batch)
        jax.block_until_ready((feat, feat_mean))

        ref_feat, ref_mean = _reference(images, weight, bias)
        # Tolerance accounts for the bf16 MXU inputs.
        np.testing.assert_allclose(np.asarray(feat), np.asarray(ref_feat),
                                   rtol=5e-3, atol=5e-3)
        np.testing.assert_allclose(np.asarray(feat_mean), np.asarray(ref_mean),
                                   rtol=5e-3, atol=5e-3)

    key = jax.random.PRNGKey(0)
    k0, k1 = jax.random.split(key)
    # Small shapes consistent with the module: single fat step, full-extent blocks.
    run_case(k0, B=2, R=8, D=32, E=32)
    # Multi-step path: ragged final batch block, R % 8 != 0, nonzero bias.
    run_case(k1, B=10, R=12, D=48, E=64, block_batch=8, random_bias=True)

    print("KERNEL_OK")
</pallas_src>

<mosaic_0001>
module attributes {stable_mosaic.version = 11 : i64} {
  func.func @_encoder_kernel(%arg0: i32, %arg1: memref<16x32xf32, #tpu.memory_space<vmem>>, %arg2: memref<32x32xbf16, #tpu.memory_space<vmem>>, %arg3: memref<1x32xf32, #tpu.memory_space<vmem>>, %arg4: memref<16x32xf32, #tpu.memory_space<vmem>>, %arg5: memref<2x32xf32, #tpu.memory_space<vmem>>) attributes {dimension_semantics = [#tpu.dimension_semantics<parallel>], iteration_bounds = array<i64: 1>, scalar_prefetch = 0 : i64, scratch_operands = 0 : i64, tpu.core_type = #tpu.core_type<tc>, window_params = [{transform_indices = @transform_0, window_bounds = array<i64: 16, 32>}, {pipeline_mode = #tpu.pipeline_mode<synchronous>, transform_indices = @transform_1, window_bounds = array<i64: 32, 32>}, {pipeline_mode = #tpu.pipeline_mode<synchronous>, transform_indices = @transform_2, window_bounds = array<i64: 1, 32>}, {transform_indices = @transform_3, window_bounds = array<i64: 16, 32>}, {transform_indices = @transform_4, window_bounds = array<i64: 2, 32>}]} {
    %c0 = arith.constant 0 : index
    %c0_0 = arith.constant 0 : index
    %0 = vector.load %arg1[%c0, %c0_0] : memref<16x32xf32, #tpu.memory_space<vmem>>, vector<16x32xf32>
    %1 = arith.truncf %0 : vector<16x32xf32> to vector<16x32xbf16>
    %c0_1 = arith.constant 0 : index
    %c0_2 = arith.constant 0 : index
    %2 = vector.load %arg2[%c0_1, %c0_2] : memref<32x32xbf16, #tpu.memory_space<vmem>>, vector<32x32xbf16>
    %cst = arith.constant dense<0.000000e+00> : vector<16x32xf32>
    %3 = tpu.matmul %1, %2, %cst {dimension_numbers = #tpu.dot_dimension_numbers<[1], [1], [0], [0], [0, 0, 1, 0], [], []>} : vector<16x32xbf16>, vector<32x32xbf16>, vector<16x32xf32> -> vector<16x32xf32>
    %c0_3 = arith.constant 0 : index
    %c0_4 = arith.constant 0 : index
    %4 = vector.load %arg3[%c0_3, %c0_4] : memref<1x32xf32, #tpu.memory_space<vmem>>, vector<1x32xf32>
    %5 = vector.broadcast %4 : vector<1x32xf32> to vector<16x32xf32>
    %6 = arith.addf %3, %5 : vector<16x32xf32>
    %7 = arith.mulf %6, %6 : vector<16x32xf32>
    %cst_5 = arith.constant dense<0.000000e+00> : vector<16xf32>
    %8 = vector.multi_reduction <add>, %7, %cst_5 [1] : vector<16x32xf32> to vector<16xf32>
    %9 = vector.shape_cast %8 : vector<16xf32> to vector<16x1xf32>
    %cst_6 = arith.constant 1.000000e-16 : f32
    %10 = vector.broadcast %cst_6 : f32 to vector<16x1xf32>
    %11 = arith.addf %9, %10 : vector<16x1xf32>
    %12 = math.rsqrt %11 : vector<16x1xf32>
    %13 = vector.broadcast %12 : vector<16x1xf32> to vector<16x32xf32>
    %14 = arith.mulf %6, %13 : vector<16x32xf32>
    %c0_7 = arith.constant 0 : index
    %c0_8 = arith.constant 0 : index
    %15 = vector.load %arg4[%c0_7, %c0_8] : memref<16x32xf32, #tpu.memory_space<vmem>>, vector<16x32xf32>
    tpu.vector_store %arg4[%c0_7, %c0_8], %14 {strides = array<i32>} : memref<16x32xf32, #tpu.memory_space<vmem>>, vector<16x32xf32>,
    %16 = tpu.iota {dimensions = array<i32: 0>} : vector<2x16xi32>
    %17 = tpu.iota {dimensions = array<i32: 1>} : vector<2x16xi32>
    %c8_i32 = arith.constant 8 : i32
    %18 = vector.broadcast %c8_i32 : i32 to vector<2x16xi32>
    %19 = arith.muli %16, %18 : vector<2x16xi32>
    %20 = arith.cmpi sge, %17, %19 : vector<2x16xi32>
    %c8_i32_9 = arith.constant 8 : i32
    %21 = vector.broadcast %c8_i32_9 : i32 to vector<2x16xi32>
    %22 = arith.addi %19, %21 : vector<2x16xi32>
    %23 = arith.cmpi slt, %17, %22 : vector<2x16xi32>
    %24 = arith.andi %20, %23 : vector<2x16xi1>
    %cst_10 = arith.constant 1.250000e-01 : f32
    %cst_11 = arith.constant 0.000000e+00 : f32
    %25 = vector.broadcast %cst_10 : f32 to vector<2x16xf32>
    %26 = vector.broadcast %cst_11 : f32 to vector<2x16xf32>
    %27 = arith.select %24, %25, %26 : vector<2x16xi1>, vector<2x16xf32>
    %cst_12 = arith.constant dense<0.000000e+00> : vector<2x32xf32>
    %28 = tpu.matmul %27, %14, %cst_12 {dimension_numbers = #tpu.dot_dimension_numbers<[1], [0], [0], [1], [0, 0, 1, 1], [], []>} : vector<2x16xf32>, vector<16x32xf32>, vector<2x32xf32> -> vector<2x32xf32>
    %c0_13 = arith.constant 0 : index
    %c0_14 = arith.constant 0 : index
    %29 = vector.load %arg5[%c0_13, %c0_14] : memref<2x32xf32, #tpu.memory_space<vmem>>, vector<2x32xf32>
    tpu.vector_store %arg5[%c0_13, %c0_14], %28 {strides = array<i32>} : memref<2x32xf32, #tpu.memory_space<vmem>>, vector<2x32xf32>,
    return
  }
  func.func @transform_0(%arg0: i32) -> (i32, i32) {
    %c0_i32 = arith.constant 0 : i32
    %c0_i32_0 = arith.constant 0 : i32
    return %arg0, %c0_i32 : i32, i32
  }
  func.func @transform_1(%arg0: i32) -> (i32, i32) {
    %c0_i32 = arith.constant 0 : i32
    %c0_i32_0 = arith.constant 0 : i32
    %c0_i32_1 = arith.constant 0 : i32
    return %c0_i32, %c0_i32_0 : i32, i32
  }
  func.func @transform_2(%arg0: i32) -> (i32, i32) {
    %c0_i32 = arith.constant 0 : i32
    %c0_i32_0 = arith.constant 0 : i32
    %c0_i32_1 = arith.constant 0 : i32
    return %c0_i32, %c0_i32_0 : i32, i32
  }
  func.func @transform_3(%arg0: i32) -> (i32, i32) {
    %c0_i32 = arith.constant 0 : i32
    %c0_i32_0 = arith.constant 0 : i32
    return %arg0, %c0_i32 : i32, i32
  }
  func.func @transform_4(%arg0: i32) -> (i32, i32) {
    %c0_i32 = arith.constant 0 : i32
    %c0_i32_0 = arith.constant 0 : i32
    return %arg0, %c0_i32 : i32, i32
  }
}

module attributes {stable_mosaic.version = 11 : i64} {
  func.func @_encoder_kernel(%arg0: i32, %arg1: memref<16x32xf32, #tpu.memory_space<vmem>>, %arg2: memref<32x32xbf16, #tpu.memory_space<vmem>>, %arg3: memref<1x32xf32, #tpu.memory_space<vmem>>, %arg4: memref<16x32xf32, #tpu.memory_space<vmem>>, %arg5: memref<2x32xf32, #tpu.memory_space<vmem>>) attributes {dimension_semantics = [#tpu.dimension_semantics<parallel>], iteration_bounds = array<i64: 1>, scalar_prefetch = 0 : i64, scratch_operands = 0 : i64, tpu.core_type = #tpu.core_type<tc>, window_params = [{transform_indices = @transform_0, window_bounds = array<i64: 16, 32>}, {pipeline_mode = #tpu.pipeline_mode<synchronous>, transform_indices = @transform_1, window_bounds = array<i64: 32, 32>}, {pipeline_mode = #tpu.pipeline_mode<synchronous>, transform_indices = @transform_2, window_bounds = array<i64: 1, 32>}, {transform_indices = @transform_3, window_bounds = array<i64: 16, 32>}, {transform_indices = @transform_4, window_bounds = array<i64: 2, 32>}]} {
    %c0 = arith.constant 0 : index
    %c0_0 = arith.constant 0 : index
    %0 = vector.load %arg1[%c0, %c0_0] : memref<16x32xf32, #tpu.memory_space<vmem>>, vector<16x32xf32>
    %1 = arith.truncf %0 : vector<16x32xf32> to vector<16x32xbf16>
    %c0_1 = arith.constant 0 : index
    %c0_2 = arith.constant 0 : index
    %2 = vector.load %arg2[%c0_1, %c0_2] : memref<32x32xbf16, #tpu.memory_space<vmem>>, vector<32x32xbf16>
    %cst = arith.constant dense<0.000000e+00> : vector<16x32xf32>
    %3 = tpu.matmul %1, %2, %cst {dimension_numbers = #tpu.dot_dimension_numbers<[1], [1], [0], [0], [0, 0, 1, 0], [], []>} : vector<16x32xbf16>, vector<32x32xbf16>, vector<16x32xf32> -> vector<16x32xf32>
    %c0_3 = arith.constant 0 : index
    %c0_4 = arith.constant 0 : index
    %4 = vector.load %arg3[%c0_3, %c0_4] : memref<1x32xf32, #tpu.memory_space<vmem>>, vector<1x32xf32>
    %5 = vector.broadcast %4 : vector<1x32xf32> to vector<16x32xf32>
    %6 = arith.addf %3, %5 : vector<16x32xf32>
    %7 = arith.mulf %6, %6 : vector<16x32xf32>
    %cst_5 = arith.constant dense<0.000000e+00> : vector<16xf32>
    %8 = vector.multi_reduction <add>, %7, %cst_5 [1] : vector<16x32xf32> to vector<16xf32>
    %9 = vector.shape_cast %8 : vector<16xf32> to vector<16x1xf32>
    %cst_6 = arith.constant 1.000000e-16 : f32
    %10 = vector.broadcast %cst_6 : f32 to vector<16x1xf32>
    %11 = arith.addf %9, %10 : vector<16x1xf32>
    %12 = math.rsqrt %11 : vector<16x1xf32>
    %13 = vector.broadcast %12 : vector<16x1xf32> to vector<16x32xf32>
    %14 = arith.mulf %6, %13 : vector<16x32xf32>
    %c0_7 = arith.constant 0 : index
    %c0_8 = arith.constant 0 : index
    %15 = vector.load %arg4[%c0_7, %c0_8] : memref<16x32xf32, #tpu.memory_space<vmem>>, vector<16x32xf32>
    tpu.vector_store %arg4[%c0_7, %c0_8], %14 {strides = array<i32>} : memref<16x32xf32, #tpu.memory_space<vmem>>, vector<16x32xf32>,
    %16 = tpu.iota {dimensions = array<i32: 0>} : vector<2x16xi32>
    %17 = tpu.iota {dimensions = array<i32: 1>} : vector<2x16xi32>
    %c8_i32 = arith.constant 8 : i32
    %18 = vector.broadcast %c8_i32 : i32 to vector<2x16xi32>
    %19 = arith.muli %16, %18 : vector<2x16xi32>
    %20 = arith.cmpi sge, %17, %19 : vector<2x16xi32>
    %c8_i32_9 = arith.constant 8 : i32
    %21 = vector.broadcast %c8_i32_9 : i32 to vector<2x16xi32>
    %22 = arith.addi %19, %21 : vector<2x16xi32>
    %23 = arith.cmpi slt, %17, %22 : vector<2x16xi32>
    %24 = arith.andi %20, %23 : vector<2x16xi1>
    %cst_10 = arith.constant 1.250000e-01 : f32
    %cst_11 = arith.constant 0.000000e+00 : f32
    %25 = vector.broadcast %cst_10 : f32 to vector<2x16xf32>
    %26 = vector.broadcast %cst_11 : f32 to vector<2x16xf32>
    %27 = arith.select %24, %25, %26 : vector<2x16xi1>, vector<2x16xf32>
    %cst_12 = arith.constant dense<0.000000e+00> : vector<2x32xf32>
    %28 = tpu.matmul %27, %14, %cst_12 {dimension_numbers = #tpu.dot_dimension_numbers<[1], [0], [0], [1], [0, 0, 1, 1], [], []>} : vector<2x16xf32>, vector<16x32xf32>, vector<2x32xf32> -> vector<2x32xf32>
    %c0_13 = arith.constant 0 : index
    %c0_14 = arith.constant 0 : index
    %29 = vector.load %arg5[%c0_13, %c0_14] : memref<2x32xf32, #tpu.memory_space<vmem>>, vector<2x32xf32>
    tpu.vector_store %arg5[%c0_13, %c0_14], %28 {strides = array<i32>} : memref<2x32xf32, #tpu.memory_space<vmem>>, vector<2x32xf32>,
    return
  }
  func.func @transform_0(%arg0: i32) -> (i32, i32) {
    %c0_i32 = arith.constant 0 : i32
    %c0_i32_0 = arith.constant 0 : i32
    return %arg0, %c0_i32 : i32, i32
  }
  func.func @transform_1(%arg0: i32) -> (i32, i32) {
    %c0_i32 = arith.constant 0 : i32
    %c0_i32_0 = arith.constant 0 : i32
    %c0_i32_1 = arith.constant 0 : i32
    return %c0_i32, %c0_i32_0 : i32, i32
  }
  func.func @transform_2(%arg0: i32) -> (i32, i32) {
    %c0_i32 = arith.constant 0 : i32
    %c0_i32_0 = arith.constant 0 : i32
    %c0_i32_1 = arith.constant 0 : i32
    return %c0_i32, %c0_i32_0 : i32, i32
  }
  func.func @transform_3(%arg0: i32) -> (i32, i32) {
    %c0_i32 = arith.constant 0 : i32
    %c0_i32_0 = arith.constant 0 : i32
    return %arg0, %c0_i32 : i32, i32
  }
  func.func @transform_4(%arg0: i32) -> (i32, i32) {
    %c0_i32 = arith.constant 0 : i32
    %c0_i32_0 = arith.constant 0 : i32
    return %arg0, %c0_i32 : i32, i32
  }
}

</mosaic_0001>

<llo_original>
// kernel: tpu_custom_call.1
$region0: #{tpu_custom_call.1}
  #allocation0 [shape = 'u32[]', space=smem, size = 0x4, offset = 0x4, fixed_abs, tag = 'smem constant byte address 0x4 - core index']
  #allocation1 [shape = 'u32[72,128]{1,0:T(1,128)}', space=vmem, size = 0x9000, scoped, tag = 'internal scratch']
  %s0 = inlined_call_operand.hbm [shape: f32[16,32], index: 0, kind: input, shape index: {}]
  %s1 = inlined_call_operand.hbm [shape: bf16[32,32], index: 1, kind: input, shape index: {}]
  %s2 = inlined_call_operand.vmem [shape: f32[1,32], index: 2, kind: input, shape index: {}]
  %s3 = inlined_call_operand.hbm [shape: f32[16,32], index: 3, kind: output, shape index: {0}]
  %s4 = inlined_call_operand.hbm [shape: f32[2,32], index: 4, kind: output, shape index: {1}]
  %5 = xla_tuple %s3, %s4
  %s6 = sld [smem:[#allocation0]]
  $region38: #{tpu_custom_call.1} parent=0
    _
  %s8 = ssub.s32 1, %s6
  %s9 = scalar_select 0, %s8, %s6
  $region1: #{tpu_custom_call.1} parent=0
    #allocation2 [shape = 'u8[8192]{0}', space=vmem, size = 0x2000, scoped, tag = 'input window, operand 0, single buffered']
    #allocation3 [shape = 's32[1]{0}', space=sflag, size = 0x4, scoped, tag = 'scoped memory for tpu_custom_call.1']
    #allocation4 [shape = 's32[1]{0}', space=sflag, size = 0x4, scoped, tag = 'scoped memory for tpu_custom_call.1']
    #allocation5 [shape = 'u8[8192]{0}', space=vmem, size = 0x2000, scoped, tag = 'input window, operand 1, single buffered']
    #allocation6 [shape = 's32[1]{0}', space=sflag, size = 0x4, scoped, tag = 'scoped memory for tpu_custom_call.1']
    #allocation7 [shape = 'u8[8192]{0}', space=vmem, size = 0x2000, scoped, tag = 'output window, operand 0, single buffered']
    #allocation8 [shape = 'u8[1024]{0}', space=vmem, size = 0x400, scoped, tag = 'output window, operand 1, single buffered']
    #allocation9 [shape = 's32[1]{0}', space=sflag, size = 0x4, scoped, tag = 'scoped memory for tpu_custom_call.1']
    %10 = vsyncpa [#allocation3], 0
    %11 = vsyncpa [#allocation6], 0
    %12 = vsyncpa [#allocation4], 0
    %13 = vsyncpa [#allocation9], 0
    // Predicated region
    $region2: #{tpu_custom_call.1} parent=1 // pred_check
      _
    $region3: #{tpu_custom_call.1} parent=1 // pred_check_branch
      %15 = sbr.rel (0) target = $region5
    $region4: #{tpu_custom_call.1} parent=1 // pred_region
      %17 = vsyncadd [#allocation3], 0
      %s18 = sshll.u32 %s0, 4
      %s19 = int_to_ptr.hbm [resolvable:$true] %s18
      %s20 = sshll.u32 [#allocation2], 4
      %s21 = int_to_ptr.vmem [resolvable:$true] %s20
      %26 = dma.hbm_to_vmem [thread:$0]  %s19, 256, %s21, [#allocation3], 128, 128, 8
    $region5: #{tpu_custom_call.1} parent=1 // pred_fallthru
      _
    // Predicated region
    $region6: #{tpu_custom_call.1} parent=1 // pred_check
      _
    $region7: #{tpu_custom_call.1} parent=1 // pred_check_branch
      %28 = sbr.rel (0) target = $region9
    $region8: #{tpu_custom_call.1} parent=1 // pred_region
      %30 = vsyncadd [#allocation6], 0
      %s31 = sshll.u32 %s1, 4
      %s32 = int_to_ptr.hbm [resolvable:$true] %s31
      %s33 = sshll.u32 [#allocation5], 4
      %s34 = int_to_ptr.vmem [resolvable:$true] %s33
      %39 = dma.hbm_to_vmem [thread:$0]  %s32, 256, %s34, [#allocation6], 64, 64, 4
    $region9: #{tpu_custom_call.1} parent=1 // pred_fallthru
      _
    // Predicated region
    $region10: #{tpu_custom_call.1} parent=1 // pred_check
      _
    $region11: #{tpu_custom_call.1} parent=1 // pred_check_branch
      %41 = sbr.rel (0) target = $region13
    $region12: #{tpu_custom_call.1} parent=1 // pred_region
      _
    $region13: #{tpu_custom_call.1} parent=1 // pred_fallthru
      _
    // Predicated region
    $region14: #{tpu_custom_call.1} parent=1 // pred_check
      _
    $region15: #{tpu_custom_call.1} parent=1 // pred_check_branch
      %43 = sbr.rel (0) target = $region17
    $region16: #{tpu_custom_call.1} parent=1 // pred_region
      %45 = dma.done [#allocation3], 256
    $region17: #{tpu_custom_call.1} parent=1 // pred_fallthru
      _
    // Predicated region
    $region18: #{tpu_custom_call.1} parent=1 // pred_check
      _
    $region19: #{tpu_custom_call.1} parent=1 // pred_check_branch
      %47 = sbr.rel (0) target = $region21
    $region20: #{tpu_custom_call.1} parent=1 // pred_region
      %49 = dma.done [#allocation6], 256
    $region21: #{tpu_custom_call.1} parent=1 // pred_fallthru
      _
    %v51 = vld [vmem:[#allocation2] sm:$0xff]
    %v52 = vld [vmem:[#allocation2 + $0x8] sm:$0xff]
    %v53 = vpack.c.bf16 %v52, %v51
    %v54 = vld [vmem:[#allocation5] sm:$0xf]
    %v55 = vld [vmem:[#allocation5 + $0x4] sm:$0xf]
    %v56 = vld [vmem:[#allocation5 + $0x8] sm:$0xf]
    %v57 = vld [vmem:[#allocation5 + $0xc] sm:$0xf]
    %v58 = vld [vmem:[%s2] sm:$0x1]
    %v60 = vperm.slane %v58, 0
    %v66 = vunpack.c.l.b16 %v54
    %v67 = vunpack.c.l.b16 %v55
    %v68 = vunpack.c.l.b16 %v56
    %v69 = vunpack.c.l.b16 %v57
    %v70 = vpack.c.b16 %v67, %v66
    %v71 = vpack.c.b16 %v69, %v68
    %vm72 = vcmask 261120
    %v74 = vsel %vm72, %v53, 0
    %v77 = vsel %vm72, %v70, 0
    %v80 = vsel %vm72, %v71, 0
    %82 = vmatpush.bf16.xpose.msra.mxu0 0
    %83 = vmatpush.bf16.xpose.msra.mxu0 0
    %84 = vmatpush.bf16.xpose.msra.mxu0 0
    %85 = vmatpush.bf16.xpose.msra.mxu0 0
    %86 = vmatpush.bf16.xpose.msra.mxu0 0
    %87 = vmatpush.bf16.xpose.msra.mxu0 0
    %88 = vmatpush.bf16.xpose.msra.mxu0 %v80
    %89 = vmatpush.bf16.xpose.msra.mxu0 %v77
    %90 = vmatmul.bf16.gmra.mxu0 %v74
    %v91 = vpop.f32.mrf.mxu0
    %v92 = vadd.f32 %v60, %v91
    %v93 = vpop.f32.mrf.mxu0
    %v94 = vadd.f32 %v60, %v93
    %95 = vdwg.mxu0
    %v96 = vmul.f32 %v92, %v92
    %v97 = vmul.f32 %v94, %v94
    %v98 = vsel %vm72, %v96, 0.0
    %99 = vadd.xlane.f32.xlu0 %v98
    %v100 = vpop.xlane.xlu0 %99
    %v101 = vsel %vm72, %v97, 0.0
    %102 = vadd.xlane.f32.xlu0 %v101
    %v103 = vpop.xlane.xlu0 %102
    %v104 = vadd.f32 %v100, 1e-16
    %v105 = vadd.f32 %v103, 1e-16
    %v106 = vrsqrt.pop %v104
    %v107 = vmul.f32 %v106, %v104
    %v108 = vmul.f32 %v107, %v106
    %v109 = vmul.f32 0.5, %v108
    %v110 = vsub.f32 1.5, %v109
    %v111 = vmul.f32 %v106, %v110
    %vm112 = vweird.f32 %v104
    %vm113 = vweird.f32 %v106
    %vm114 = vmor %vm112, %vm113
    %v115 = vsel %vm114, %v106, %v111
    %v116 = vrsqrt.pop %v105
    %v117 = vmul.f32 %v116, %v105
    %v118 = vmul.f32 %v117, %v116
    %v119 = vmul.f32 0.5, %v118
    %v120 = vsub.f32 1.5, %v119
    %v121 = vmul.f32 %v116, %v120
    %vm122 = vweird.f32 %v105
    %vm123 = vweird.f32 %v116
    %vm124 = vmor %vm122, %vm123
    %v125 = vsel %vm124, %v116, %v121
    %v126 = vmul.f32 %v92, %v115
    %v127 = vmul.f32 %v94, %v125
    %128 = vst.msk [vmem:[#allocation7] sm:$0xff] %vm72, %v126
    %129 = vst.msk [vmem:[#allocation7 + $0x8] sm:$0xff] %vm72, %v127
    %v130 = vlaneseq
    %v131 = vshrl.u32 %v130, 7
    %v132 = vlaneseq
    %v133 = vand.u32 %v132, 127
    %v134 = vmul.u32 %v131, 8
    %vm135 = vcmp.ge.s32.totalorder %v133, %v134
    %v136 = vadd.s32 %v134, 8
    %vm137 = vcmp.lt.s32.totalorder %v133, %v136
    %vm138 = vmand %vm135, %vm137
    %v139 = vsel %vm138, 0.125, 0.0
    %vm140 = vcmask 130048
    %v142 = vsel %vm140, %v139, 0
    %144 = vmatpush.msra.mxu0 0.0
    %145 = vmatpush.msra.mxu0 0.0
    %146 = vmatpush.msra.mxu0 0.0
    %147 = vmatpush.msra.mxu0 0.0
    %148 = vmatpush.msra.mxu0 0.0
    %149 = vmatpush.msra.mxu0 0.0
    %150 = vmatpush.msra.mxu0 0.0
    %151 = vmatpush.msra.mxu0 0.0
    %152 = vmatpush.msra.mxu0 0.0
    %153 = vmatpush.msra.mxu0 0.0
    %154 = vmatpush.msra.mxu0 0.0
    %155 = vmatpush.msra.mxu0 0.0
    %156 = vmatpush.msra.mxu0 0.0
    %157 = vmatpush.msra.mxu0 0.0
    %158 = vmatpush.msra.mxu0 %v127
    %159 = vmatpush.msra.mxu0 %v126
    %160 = vmatmul.f32.gmra.mxu0 %v142
    %v161 = vpop.f32.mrf.mxu0
    %v162 = vadd.f32 0.0, %v161
    %163 = vdwg.mxu0
    %vm164 = vcmask 254976
    %165 = vst.msk [vmem:[#allocation8] sm:$0x3] %vm164, %v162
    // Predicated region
    $region22: #{tpu_custom_call.1} parent=1 // pred_check
      _
    $region23: #{tpu_custom_call.1} parent=1 // pred_check_branch
      %167 = sbr.rel (0) target = $region25
    $region24: #{tpu_custom_call.1} parent=1 // pred_region
      %169 = vsyncadd [#allocation4], 0
      %s170 = sshll.u32 [#allocation7], 4
      %s171 = int_to_ptr.vmem [resolvable:$true] %s170
      %s172 = sshll.u32 %s3, 4
      %s173 = int_to_ptr.hbm [resolvable:$true] %s172
      %178 = dma.vmem_to_hbm [thread:$0]  %s171, 256, %s173, [#allocation4], 128, 128, 8
    $region25: #{tpu_custom_call.1} parent=1 // pred_fallthru
      _
    // Predicated region
    $region26: #{tpu_custom_call.1} parent=1 // pred_check
      _
    $region27: #{tpu_custom_call.1} parent=1 // pred_check_branch
      %180 = sbr.rel (0) target = $region29
    $region28: #{tpu_custom_call.1} parent=1 // pred_region
      %182 = vsyncadd [#allocation9], 0
      %s184 = sshll.u32 [#allocation8], 4
      %s185 = int_to_ptr.vmem [resolvable:$true] %s184
      %s186 = sshll.u32 %s4, 4
      %s187 = int_to_ptr.hbm [resolvable:$true] %s186
      %189 = dma.vmem_to_hbm [thread:$0]  %s185, 32, %s187, [#allocation9]
    $region29: #{tpu_custom_call.1} parent=1 // pred_fallthru
      _
    // Predicated region
    $region30: #{tpu_custom_call.1} parent=1 // pred_check
      _
    $region31: #{tpu_custom_call.1} parent=1 // pred_check_branch
      %191 = sbr.rel (0) target = $region33
    $region32: #{tpu_custom_call.1} parent=1 // pred_region
      %193 = dma.done [#allocation4], 256
    $region33: #{tpu_custom_call.1} parent=1 // pred_fallthru
      _
    // Predicated region
    $region34: #{tpu_custom_call.1} parent=1 // pred_check
      _
    $region35: #{tpu_custom_call.1} parent=1 // pred_check_branch
      %195 = sbr.rel (0) target = $region37
    $region36: #{tpu_custom_call.1} parent=1 // pred_region
      %197 = dma.done [#allocation9], 32
    $region37: #{tpu_custom_call.1} parent=1 // pred_fallthru
      _
    %198 = vsyncpa [#allocation3], 1
    %199 = vsyncpa [#allocation6], 1
    %200 = vsyncpa [#allocation4], 1
    %201 = vsyncpa [#allocation9], 1

// kernel: tpu_custom_call.1
$region0: #{tpu_custom_call.1}
  #allocation0 [shape = 'u32[]', space=smem, size = 0x4, offset = 0x4, fixed_abs, tag = 'smem constant byte address 0x4 - core index']
  #allocation1 [shape = 'u32[72,128]{1,0:T(1,128)}', space=vmem, size = 0x9000, scoped, tag = 'internal scratch']
  %s0 = inlined_call_operand.hbm [shape: f32[16,32], index: 0, kind: input, shape index: {}]
  %s1 = inlined_call_operand.hbm [shape: bf16[32,32], index: 1, kind: input, shape index: {}]
  %s2 = inlined_call_operand.vmem [shape: f32[1,32], index: 2, kind: input, shape index: {}]
  %s3 = inlined_call_operand.hbm [shape: f32[16,32], index: 3, kind: output, shape index: {0}]
  %s4 = inlined_call_operand.hbm [shape: f32[2,32], index: 4, kind: output, shape index: {1}]
  %5 = xla_tuple %s3, %s4
  %s6 = sld [smem:[#allocation0]]
  $region38: #{tpu_custom_call.1} parent=0
    _
  %s8 = ssub.s32 1, %s6
  %s9 = scalar_select 0, %s8, %s6
  $region1: #{tpu_custom_call.1} parent=0
    #allocation2 [shape = 'u8[8192]{0}', space=vmem, size = 0x2000, scoped, tag = 'input window, operand 0, single buffered']
    #allocation3 [shape = 's32[1]{0}', space=sflag, size = 0x4, scoped, tag = 'scoped memory for tpu_custom_call.1']
    #allocation4 [shape = 's32[1]{0}', space=sflag, size = 0x4, scoped, tag = 'scoped memory for tpu_custom_call.1']
    #allocation5 [shape = 'u8[8192]{0}', space=vmem, size = 0x2000, scoped, tag = 'input window, operand 1, single buffered']
    #allocation6 [shape = 's32[1]{0}', space=sflag, size = 0x4, scoped, tag = 'scoped memory for tpu_custom_call.1']
    #allocation7 [shape = 'u8[8192]{0}', space=vmem, size = 0x2000, scoped, tag = 'output window, operand 0, single buffered']
    #allocation8 [shape = 'u8[1024]{0}', space=vmem, size = 0x400, scoped, tag = 'output window, operand 1, single buffered']
    #allocation9 [shape = 's32[1]{0}', space=sflag, size = 0x4, scoped, tag = 'scoped memory for tpu_custom_call.1']
    %10 = vsyncpa [#allocation3], 0
    %11 = vsyncpa [#allocation6], 0
    %12 = vsyncpa [#allocation4], 0
    %13 = vsyncpa [#allocation9], 0
    // Predicated region
    $region2: #{tpu_custom_call.1} parent=1 // pred_check
      _
    $region3: #{tpu_custom_call.1} parent=1 // pred_check_branch
      %15 = sbr.rel (0) target = $region5
    $region4: #{tpu_custom_call.1} parent=1 // pred_region
      %17 = vsyncadd [#allocation3], 0
      %s18 = sshll.u32 %s0, 4
      %s19 = int_to_ptr.hbm [resolvable:$true] %s18
      %s20 = sshll.u32 [#allocation2], 4
      %s21 = int_to_ptr.vmem [resolvable:$true] %s20
      %26 = dma.hbm_to_vmem [thread:$0]  %s19, 256, %s21, [#allocation3], 128, 128, 8
    $region5: #{tpu_custom_call.1} parent=1 // pred_fallthru
      _
    // Predicated region
    $region6: #{tpu_custom_call.1} parent=1 // pred_check
      _
    $region7: #{tpu_custom_call.1} parent=1 // pred_check_branch
      %28 = sbr.rel (0) target = $region9
    $region8: #{tpu_custom_call.1} parent=1 // pred_region
      %30 = vsyncadd [#allocation6], 0
      %s31 = sshll.u32 %s1, 4
      %s32 = int_to_ptr.hbm [resolvable:$true] %s31
      %s33 = sshll.u32 [#allocation5], 4
      %s34 = int_to_ptr.vmem [resolvable:$true] %s33
      %39 = dma.hbm_to_vmem [thread:$0]  %s32, 256, %s34, [#allocation6], 64, 64, 4
    $region9: #{tpu_custom_call.1} parent=1 // pred_fallthru
      _
    // Predicated region
    $region10: #{tpu_custom_call.1} parent=1 // pred_check
      _
    $region11: #{tpu_custom_call.1} parent=1 // pred_check_branch
      %41 = sbr.rel (0) target = $region13
    $region12: #{tpu_custom_call.1} parent=1 // pred_region
      _
    $region13: #{tpu_custom_call.1} parent=1 // pred_fallthru
      _
    // Predicated region
    $region14: #{tpu_custom_call.1} parent=1 // pred_check
      _
    $region15: #{tpu_custom_call.1} parent=1 // pred_check_branch
      %43 = sbr.rel (0) target = $region17
    $region16: #{tpu_custom_call.1} parent=1 // pred_region
      %45 = dma.done [#allocation3], 256
    $region17: #{tpu_custom_call.1} parent=1 // pred_fallthru
      _
    // Predicated region
    $region18: #{tpu_custom_call.1} parent=1 // pred_check
      _
    $region19: #{tpu_custom_call.1} parent=1 // pred_check_branch
      %47 = sbr.rel (0) target = $region21
    $region20: #{tpu_custom_call.1} parent=1 // pred_region
      %49 = dma.done [#allocation6], 256
    $region21: #{tpu_custom_call.1} parent=1 // pred_fallthru
      _
    %v51 = vld [vmem:[#allocation2] sm:$0xff]
    %v52 = vld [vmem:[#allocation2 + $0x8] sm:$0xff]
    %v53 = vpack.c.bf16 %v52, %v51
    %v54 = vld [vmem:[#allocation5] sm:$0xf]
    %v55 = vld [vmem:[#allocation5 + $0x4] sm:$0xf]
    %v56 = vld [vmem:[#allocation5 + $0x8] sm:$0xf]
    %v57 = vld [vmem:[#allocation5 + $0xc] sm:$0xf]
    %v58 = vld [vmem:[%s2] sm:$0x1]
    %v60 = vperm.slane %v58, 0
    %v66 = vunpack.c.l.b16 %v54
    %v67 = vunpack.c.l.b16 %v55
    %v68 = vunpack.c.l.b16 %v56
    %v69 = vunpack.c.l.b16 %v57
    %v70 = vpack.c.b16 %v67, %v66
    %v71 = vpack.c.b16 %v69, %v68
    %vm72 = vcmask 261120
    %v74 = vsel %vm72, %v53, 0
    %v77 = vsel %vm72, %v70, 0
    %v80 = vsel %vm72, %v71, 0
    %82 = vmatpush.bf16.xpose.msra.mxu0 0
    %83 = vmatpush.bf16.xpose.msra.mxu0 0
    %84 = vmatpush.bf16.xpose.msra.mxu0 0
    %85 = vmatpush.bf16.xpose.msra.mxu0 0
    %86 = vmatpush.bf16.xpose.msra.mxu0 0
    %87 = vmatpush.bf16.xpose.msra.mxu0 0
    %88 = vmatpush.bf16.xpose.msra.mxu0 %v80
    %89 = vmatpush.bf16.xpose.msra.mxu0 %v77
    %90 = vmatmul.bf16.gmra.mxu0 %v74
    %v91 = vpop.f32.mrf.mxu0
    %v92 = vadd.f32 %v60, %v91
    %v93 = vpop.f32.mrf.mxu0
    %v94 = vadd.f32 %v60, %v93
    %95 = vdwg.mxu0
    %v96 = vmul.f32 %v92, %v92
    %v97 = vmul.f32 %v94, %v94
    %v98 = vsel %vm72, %v96, 0.0
    %99 = vadd.xlane.f32.xlu0 %v98
    %v100 = vpop.xlane.xlu0 %99
    %v101 = vsel %vm72, %v97, 0.0
    %102 = vadd.xlane.f32.xlu0 %v101
    %v103 = vpop.xlane.xlu0 %102
    %v104 = vadd.f32 %v100, 1e-16
    %v105 = vadd.f32 %v103, 1e-16
    %v106 = vrsqrt.pop %v104
    %v107 = vmul.f32 %v106, %v104
    %v108 = vmul.f32 %v107, %v106
    %v109 = vmul.f32 0.5, %v108
    %v110 = vsub.f32 1.5, %v109
    %v111 = vmul.f32 %v106, %v110
    %vm112 = vweird.f32 %v104
    %vm113 = vweird.f32 %v106
    %vm114 = vmor %vm112, %vm113
    %v115 = vsel %vm114, %v106, %v111
    %v116 = vrsqrt.pop %v105
    %v117 = vmul.f32 %v116, %v105
    %v118 = vmul.f32 %v117, %v116
    %v119 = vmul.f32 0.5, %v118
    %v120 = vsub.f32 1.5, %v119
    %v121 = vmul.f32 %v116, %v120
    %vm122 = vweird.f32 %v105
    %vm123 = vweird.f32 %v116
    %vm124 = vmor %vm122, %vm123
    %v125 = vsel %vm124, %v116, %v121
    %v126 = vmul.f32 %v92, %v115
    %v127 = vmul.f32 %v94, %v125
    %128 = vst.msk [vmem:[#allocation7] sm:$0xff] %vm72, %v126
    %129 = vst.msk [vmem:[#allocation7 + $0x8] sm:$0xff] %vm72, %v127
    %v130 = vlaneseq
    %v131 = vshrl.u32 %v130, 7
    %v132 = vlaneseq
    %v133 = vand.u32 %v132, 127
    %v134 = vmul.u32 %v131, 8
    %vm135 = vcmp.ge.s32.totalorder %v133, %v134
    %v136 = vadd.s32 %v134, 8
    %vm137 = vcmp.lt.s32.totalorder %v133, %v136
    %vm138 = vmand %vm135, %vm137
    %v139 = vsel %vm138, 0.125, 0.0
    %vm140 = vcmask 130048
    %v142 = vsel %vm140, %v139, 0
    %144 = vmatpush.msra.mxu0 0.0
    %145 = vmatpush.msra.mxu0 0.0
    %146 = vmatpush.msra.mxu0 0.0
    %147 = vmatpush.msra.mxu0 0.0
    %148 = vmatpush.msra.mxu0 0.0
    %149 = vmatpush.msra.mxu0 0.0
    %150 = vmatpush.msra.mxu0 0.0
    %151 = vmatpush.msra.mxu0 0.0
    %152 = vmatpush.msra.mxu0 0.0
    %153 = vmatpush.msra.mxu0 0.0
    %154 = vmatpush.msra.mxu0 0.0
    %155 = vmatpush.msra.mxu0 0.0
    %156 = vmatpush.msra.mxu0 0.0
    %157 = vmatpush.msra.mxu0 0.0
    %158 = vmatpush.msra.mxu0 %v127
    %159 = vmatpush.msra.mxu0 %v126
    %160 = vmatmul.f32.gmra.mxu0 %v142
    %v161 = vpop.f32.mrf.mxu0
    %v162 = vadd.f32 0.0, %v161
    %163 = vdwg.mxu0
    %vm164 = vcmask 254976
    %165 = vst.msk [vmem:[#allocation8] sm:$0x3] %vm164, %v162
    // Predicated region
    $region22: #{tpu_custom_call.1} parent=1 // pred_check
      _
    $region23: #{tpu_custom_call.1} parent=1 // pred_check_branch
      %167 = sbr.rel (0) target = $region25
    $region24: #{tpu_custom_call.1} parent=1 // pred_region
      %169 = vsyncadd [#allocation4], 0
      %s170 = sshll.u32 [#allocation7], 4
      %s171 = int_to_ptr.vmem [resolvable:$true] %s170
      %s172 = sshll.u32 %s3, 4
      %s173 = int_to_ptr.hbm [resolvable:$true] %s172
      %178 = dma.vmem_to_hbm [thread:$0]  %s171, 256, %s173, [#allocation4], 128, 128, 8
    $region25: #{tpu_custom_call.1} parent=1 // pred_fallthru
      _
    // Predicated region
    $region26: #{tpu_custom_call.1} parent=1 // pred_check
      _
    $region27: #{tpu_custom_call.1} parent=1 // pred_check_branch
      %180 = sbr.rel (0) target = $region29
    $region28: #{tpu_custom_call.1} parent=1 // pred_region
      %182 = vsyncadd [#allocation9], 0
      %s184 = sshll.u32 [#allocation8], 4
      %s185 = int_to_ptr.vmem [resolvable:$true] %s184
      %s186 = sshll.u32 %s4, 4
      %s187 = int_to_ptr.hbm [resolvable:$true] %s186
      %189 = dma.vmem_to_hbm [thread:$0]  %s185, 32, %s187, [#allocation9]
    $region29: #{tpu_custom_call.1} parent=1 // pred_fallthru
      _
    // Predicated region
    $region30: #{tpu_custom_call.1} parent=1 // pred_check
      _
    $region31: #{tpu_custom_call.1} parent=1 // pred_check_branch
      %191 = sbr.rel (0) target = $region33
    $region32: #{tpu_custom_call.1} parent=1 // pred_region
      %193 = dma.done [#allocation4], 256
    $region33: #{tpu_custom_call.1} parent=1 // pred_fallthru
      _
    // Predicated region
    $region34: #{tpu_custom_call.1} parent=1 // pred_check
      _
    $region35: #{tpu_custom_call.1} parent=1 // pred_check_branch
      %195 = sbr.rel (0) target = $region37
    $region36: #{tpu_custom_call.1} parent=1 // pred_region
      %197 = dma.done [#allocation9], 32
    $region37: #{tpu_custom_call.1} parent=1 // pred_fallthru
      _
    %198 = vsyncpa [#allocation3], 1
    %199 = vsyncpa [#allocation6], 1
    %200 = vsyncpa [#allocation4], 1
    %201 = vsyncpa [#allocation9], 1

</llo_original>
